<compile_context>
chip_gen: v7x
topology: tpu7x:2x2x1
jax: 0.10.0
libtpu: 0.0.40
codegen_flags: <defaults>
</compile_context>

<pallas_src>
import math

import jax
import jax.numpy as jnp
from jax.experimental import pallas as pl
from jax.experimental.pallas import tpu as pltpu


def _self_attention3d_kernel(x_ref, wfp_ref, bfp_ref, wvt_ref, bv_ref, out_ref):
    """Single grid step handling all batches.

    x_ref:   (B, C, N)  input with N = D*H*W on the lane axis
    wfp_ref: (2C, C)    stacked [Wf; Wphi] 1x1x1 conv weights
    bfp_ref: (2C, 1)    stacked [bf; bphi]
    wvt_ref: (C, C)     Wv transposed (wvt[c, o] = wv[o, c])
    bv_ref:  (1, C)     bv as a row
    out_ref: (B, C)     sigmoid(Wv(sum_n softmax(f)_n * phi_n))
    """
    wfp = wfp_ref[...]
    bfp = bfp_ref[...]
    wvt = wvt_ref[...]
    bv = bv_ref[...]

    B, C = out_ref.shape

    rows = []
    for b in range(B):  # B is tiny and static -> unrolled, still one grid step
        xb = x_ref[b]  # (C, N)

        # Fused Wf/Wphi 1x1x1 convs == one channel matmul (MXU) + bias.
        fp = jnp.dot(wfp, xb, preferred_element_type=jnp.float32) + bfp  # (2C, N)
        f = fp[:C, :]    # (C, N)
        phi = fp[C:, :]  # (C, N)

        # Stabilized softmax over the spatial axis, without materializing eta:
        #   sum_n softmax(f)_n * phi_n == (sum_n e_n * phi_n) / (sum_n e_n)
        m = jnp.max(f, axis=-1, keepdims=True)
        e = jnp.exp(f - m)
        num = jnp.sum(e * phi, axis=-1, keepdims=True)  # (C, 1)
        den = jnp.sum(e, axis=-1, keepdims=True)        # (C, 1)
        s = num * pl.reciprocal(den, approx=False)      # (C, 1)

        # Wv on an N=1 tensor: broadcast-multiply + sublane reduce on VPU/XLU
        # (avoids an MXU pipeline fill/drain for 16 MACs).
        v = jnp.sum(wvt * s, axis=0, keepdims=True) + bv  # (1, C)
        rows.append(jax.nn.sigmoid(v))

    # One lane-dense store of all results.
    out_ref[...] = jnp.concatenate(rows, axis=0)  # (B, C)


def self_attention3d(x, wf, bf, wphi, bphi, wv, bv):
    """x: (B, C, D, H, W) float32 -> attention_map: (B, C, 1, 1, 1)."""
    B, C, D, H, W = x.shape
    N = D * H * W
    x2 = x.reshape(B, C, N)

    # Fuse Wf/Wphi weights & biases; pre-transpose Wv for the VPU path.
    wfp = jnp.concatenate([wf, wphi], axis=0)                     # (2C, C)
    bfp = jnp.concatenate([bf, bphi], axis=0).reshape(2 * C, 1)   # (2C, 1)
    wvt = wv.T                                                    # (C, C)
    bv_row = bv.reshape(1, C)                                     # (1, C)

    out = pl.pallas_call(
        _self_attention3d_kernel,
        out_shape=jax.ShapeDtypeStruct((B, C), jnp.float32),
        grid=(1,),
        in_specs=[
            pl.BlockSpec((B, C, N), lambda i: (0, 0, 0)),   # x (all batches)
            pl.BlockSpec((2 * C, C), lambda i: (0, 0)),     # fused Wf/Wphi
            pl.BlockSpec((2 * C, 1), lambda i: (0, 0)),     # fused bf/bphi
            pl.BlockSpec((C, C), lambda i: (0, 0)),         # Wv^T
            pl.BlockSpec((1, C), lambda i: (0, 0)),         # bv row
        ],
        out_specs=pl.BlockSpec((B, C), lambda i: (0, 0)),
        compiler_params=pltpu.CompilerParams(
            dimension_semantics=("arbitrary",)),
    )(x2, wfp, bfp, wvt, bv_row)

    return out.reshape(B, C, 1, 1, 1)


def _reference(x, wf, bf, wphi, bphi, wv, bv):
    """Plain-JAX reference mirroring the PyTorch forward."""
    B, C, D, H, W = x.shape
    N = D * H * W
    xf = x.reshape(B, C, N)
    f = jnp.einsum('oc,bcn->bon', wf, xf) + bf[None, :, None]
    phi = jnp.einsum('oc,bcn->bon', wphi, xf) + bphi[None, :, None]
    eta = jax.nn.softmax(f, axis=2)
    summed = jnp.sum(eta * phi, axis=2, keepdims=True)            # (B, C, 1)
    v = jnp.einsum('oc,bcn->bon', wv, summed) + bv[None, :, None]
    return jax.nn.sigmoid(v).reshape(B, C, 1, 1, 1)


def _init_conv_params(key, in_dim):
    """Deterministic init mimicking nn.Conv3d(kernel_size=1) default (uniform +/- 1/sqrt(fan_in))."""
    bound = 1.0 / math.sqrt(in_dim)
    kw, kb = jax.random.split(key)
    w = jax.random.uniform(kw, (in_dim, in_dim), jnp.float32, -bound, bound)
    b = jax.random.uniform(kb, (in_dim,), jnp.float32, -bound, bound)
    return w, b


if __name__ == "__main__":
    key = jax.random.PRNGKey(0)
    k_x, k_f, k_phi, k_v = jax.random.split(key, 4)

    B, C, D, H, W = 2, 4, 4, 8, 8   # N = D*H*W = 256
    x = jax.random.normal(k_x, (B, C, D, H, W), jnp.float32)

    wf, bf = _init_conv_params(k_f, C)
    wphi, bphi = _init_conv_params(k_phi, C)
    wv, bv = _init_conv_params(k_v, C)

    out = self_attention3d(x, wf, bf, wphi, bphi, wv, bv)
    out = jax.block_until_ready(out)

    ref = _reference(x, wf, bf, wphi, bphi, wv, bv)
    assert out.shape == (B, C, 1, 1, 1)
    assert jnp.allclose(out, ref, atol=1e-5, rtol=1e-5)

    print("KERNEL_OK")
</pallas_src>

<mosaic_0001>
module attributes {stable_mosaic.version = 11 : i64} {
  func.func @_self_attention3d_kernel(%arg0: i32, %arg1: memref<2x4x256xf32, #tpu.memory_space<vmem>>, %arg2: memref<8x4xf32, #tpu.memory_space<vmem>>, %arg3: memref<8x1xf32, #tpu.memory_space<vmem>>, %arg4: memref<4x4xf32, #tpu.memory_space<vmem>>, %arg5: memref<1x4xf32, #tpu.memory_space<vmem>>, %arg6: memref<2x4xf32, #tpu.memory_space<vmem>>) attributes {dimension_semantics = [#tpu.dimension_semantics<arbitrary>], iteration_bounds = array<i64: 1>, scalar_prefetch = 0 : i64, scratch_operands = 0 : i64, tpu.core_type = #tpu.core_type<tc>, window_params = [{pipeline_mode = #tpu.pipeline_mode<synchronous>, transform_indices = @transform_0, window_bounds = array<i64: 2, 4, 256>}, {pipeline_mode = #tpu.pipeline_mode<synchronous>, transform_indices = @transform_1, window_bounds = array<i64: 8, 4>}, {pipeline_mode = #tpu.pipeline_mode<synchronous>, transform_indices = @transform_2, window_bounds = array<i64: 8, 1>}, {pipeline_mode = #tpu.pipeline_mode<synchronous>, transform_indices = @transform_3, window_bounds = array<i64: 4, 4>}, {pipeline_mode = #tpu.pipeline_mode<synchronous>, transform_indices = @transform_4, window_bounds = array<i64: 1, 4>}, {pipeline_mode = #tpu.pipeline_mode<synchronous>, transform_indices = @transform_5, window_bounds = array<i64: 2, 4>}]} {
    %c0 = arith.constant 0 : index
    %c0_0 = arith.constant 0 : index
    %0 = vector.load %arg2[%c0, %c0_0] : memref<8x4xf32, #tpu.memory_space<vmem>>, vector<8x4xf32>
    %c0_1 = arith.constant 0 : index
    %c0_2 = arith.constant 0 : index
    %1 = vector.load %arg3[%c0_1, %c0_2] : memref<8x1xf32, #tpu.memory_space<vmem>>, vector<8x1xf32>
    %c0_3 = arith.constant 0 : index
    %c0_4 = arith.constant 0 : index
    %2 = vector.load %arg4[%c0_3, %c0_4] : memref<4x4xf32, #tpu.memory_space<vmem>>, vector<4x4xf32>
    %c0_5 = arith.constant 0 : index
    %c0_6 = arith.constant 0 : index
    %3 = vector.load %arg5[%c0_5, %c0_6] : memref<1x4xf32, #tpu.memory_space<vmem>>, vector<1x4xf32>
    %c0_7 = arith.constant 0 : index
    %c0_8 = arith.constant 0 : index
    %c0_9 = arith.constant 0 : index
    %4 = vector.load %arg1[%c0_7, %c0_8, %c0_9] : memref<2x4x256xf32, #tpu.memory_space<vmem>>, vector<1x4x256xf32>
    %5 = vector.shape_cast %4 : vector<1x4x256xf32> to vector<4x256xf32>
    %cst = arith.constant dense<0.000000e+00> : vector<8x256xf32>
    %6 = tpu.matmul %0, %5, %cst {dimension_numbers = #tpu.dot_dimension_numbers<[1], [0], [0], [1], [0, 0, 1, 1], [], []>} : vector<8x4xf32>, vector<4x256xf32>, vector<8x256xf32> -> vector<8x256xf32>
    %7 = vector.broadcast %1 : vector<8x1xf32> to vector<8x256xf32>
    %8 = arith.addf %6, %7 : vector<8x256xf32>
    %9 = vector.extract_strided_slice %8 {offsets = [0, 0], sizes = [4, 256], strides = [1, 1]} : vector<8x256xf32> to vector<4x256xf32>
    %10 = vector.extract_strided_slice %8 {offsets = [4, 0], sizes = [4, 256], strides = [1, 1]} : vector<8x256xf32> to vector<4x256xf32>
    %cst_10 = arith.constant dense<0xFF800000> : vector<4xf32>
    %11 = vector.multi_reduction <maximumf>, %9, %cst_10 [1] : vector<4x256xf32> to vector<4xf32>
    %12 = vector.shape_cast %11 : vector<4xf32> to vector<4x1xf32>
    %13 = vector.broadcast %12 : vector<4x1xf32> to vector<4x256xf32>
    %14 = arith.subf %9, %13 : vector<4x256xf32>
    %15 = math.exp %14 : vector<4x256xf32>
    %16 = arith.mulf %15, %10 : vector<4x256xf32>
    %cst_11 = arith.constant dense<0.000000e+00> : vector<4xf32>
    %17 = vector.multi_reduction <add>, %16, %cst_11 [1] : vector<4x256xf32> to vector<4xf32>
    %18 = vector.shape_cast %17 : vector<4xf32> to vector<4x1xf32>
    %cst_12 = arith.constant dense<0.000000e+00> : vector<4xf32>
    %19 = vector.multi_reduction <add>, %15, %cst_12 [1] : vector<4x256xf32> to vector<4xf32>
    %20 = vector.shape_cast %19 : vector<4xf32> to vector<4x1xf32>
    %21 = tpu.reciprocal %20 : vector<4x1xf32> -> vector<4x1xf32>
    %22 = arith.mulf %18, %21 : vector<4x1xf32>
    %23 = vector.broadcast %22 : vector<4x1xf32> to vector<4x4xf32>
    %24 = arith.mulf %2, %23 : vector<4x4xf32>
    %cst_13 = arith.constant dense<0.000000e+00> : vector<4xf32>
    %25 = vector.multi_reduction <add>, %24, %cst_13 [0] : vector<4x4xf32> to vector<4xf32>
    %26 = vector.shape_cast %25 : vector<4xf32> to vector<1x4xf32>
    %27 = arith.addf %26, %3 : vector<1x4xf32>
    %28 = arith.negf %27 : vector<1x4xf32>
    %29 = math.exp %28 : vector<1x4xf32>
    %cst_14 = arith.constant 1.000000e+00 : f32
    %30 = vector.broadcast %cst_14 : f32 to vector<1x4xf32>
    %31 = arith.addf %30, %29 : vector<1x4xf32>
    %32 = arith.divf %30, %31 : vector<1x4xf32>
    %c1 = arith.constant 1 : index
    %c0_15 = arith.constant 0 : index
    %c0_16 = arith.constant 0 : index
    %33 = vector.load %arg1[%c1, %c0_15, %c0_16] : memref<2x4x256xf32, #tpu.memory_space<vmem>>, vector<1x4x256xf32>
    %34 = vector.shape_cast %33 : vector<1x4x256xf32> to vector<4x256xf32>
    %cst_17 = arith.constant dense<0.000000e+00> : vector<8x256xf32>
    %35 = tpu.matmul %0, %34, %cst_17 {dimension_numbers = #tpu.dot_dimension_numbers<[1], [0], [0], [1], [0, 0, 1, 1], [], []>} : vector<8x4xf32>, vector<4x256xf32>, vector<8x256xf32> -> vector<8x256xf32>
    %36 = vector.broadcast %1 : vector<8x1xf32> to vector<8x256xf32>
    %37 = arith.addf %35, %36 : vector<8x256xf32>
    %38 = vector.extract_strided_slice %37 {offsets = [0, 0], sizes = [4, 256], strides = [1, 1]} : vector<8x256xf32> to vector<4x256xf32>
    %39 = vector.extract_strided_slice %37 {offsets = [4, 0], sizes = [4, 256], strides = [1, 1]} : vector<8x256xf32> to vector<4x256xf32>
    %cst_18 = arith.constant dense<0xFF800000> : vector<4xf32>
    %40 = vector.multi_reduction <maximumf>, %38, %cst_18 [1] : vector<4x256xf32> to vector<4xf32>
    %41 = vector.shape_cast %40 : vector<4xf32> to vector<4x1xf32>
    %42 = vector.broadcast %41 : vector<4x1xf32> to vector<4x256xf32>
    %43 = arith.subf %38, %42 : vector<4x256xf32>
    %44 = math.exp %43 : vector<4x256xf32>
    %45 = arith.mulf %44, %39 : vector<4x256xf32>
    %cst_19 = arith.constant dense<0.000000e+00> : vector<4xf32>
    %46 = vector.multi_reduction <add>, %45, %cst_19 [1] : vector<4x256xf32> to vector<4xf32>
    %47 = vector.shape_cast %46 : vector<4xf32> to vector<4x1xf32>
    %cst_20 = arith.constant dense<0.000000e+00> : vector<4xf32>
    %48 = vector.multi_reduction <add>, %44, %cst_20 [1] : vector<4x256xf32> to vector<4xf32>
    %49 = vector.shape_cast %48 : vector<4xf32> to vector<4x1xf32>
    %50 = tpu.reciprocal %49 : vector<4x1xf32> -> vector<4x1xf32>
    %51 = arith.mulf %47, %50 : vector<4x1xf32>
    %52 = vector.broadcast %51 : vector<4x1xf32> to vector<4x4xf32>
    %53 = arith.mulf %2, %52 : vector<4x4xf32>
    %cst_21 = arith.constant dense<0.000000e+00> : vector<4xf32>
    %54 = vector.multi_reduction <add>, %53, %cst_21 [0] : vector<4x4xf32> to vector<4xf32>
    %55 = vector.shape_cast %54 : vector<4xf32> to vector<1x4xf32>
    %56 = arith.addf %55, %3 : vector<1x4xf32>
    %57 = arith.negf %56 : vector<1x4xf32>
    %58 = math.exp %57 : vector<1x4xf32>
    %cst_22 = arith.constant 1.000000e+00 : f32
    %59 = vector.broadcast %cst_22 : f32 to vector<1x4xf32>
    %60 = arith.addf %59, %58 : vector<1x4xf32>
    %61 = arith.divf %59, %60 : vector<1x4xf32>
    %62 = tpu.concatenate %32, %61 in 0 : vector<1x4xf32>, vector<1x4xf32> -> vector<2x4xf32>
    %c0_23 = arith.constant 0 : index
    %c0_24 = arith.constant 0 : index
    %63 = vector.load %arg6[%c0_23, %c0_24] : memref<2x4xf32, #tpu.memory_space<vmem>>, vector<2x4xf32>
    tpu.vector_store %arg6[%c0_23, %c0_24], %62 {strides = array<i32>} : memref<2x4xf32, #tpu.memory_space<vmem>>, vector<2x4xf32>,
    return
  }
  func.func @transform_0(%arg0: i32) -> (i32, i32, i32) {
    %c0_i32 = arith.constant 0 : i32
    %c0_i32_0 = arith.constant 0 : i32
    %c0_i32_1 = arith.constant 0 : i32
    %c0_i32_2 = arith.constant 0 : i32
    return %c0_i32, %c0_i32_0, %c0_i32_1 : i32, i32, i32
  }
  func.func @transform_1(%arg0: i32) -> (i32, i32) {
    %c0_i32 = arith.constant 0 : i32
    %c0_i32_0 = arith.constant 0 : i32
    %c0_i32_1 = arith.constant 0 : i32
    return %c0_i32, %c0_i32_0 : i32, i32
  }
  func.func @transform_2(%arg0: i32) -> (i32, i32) {
    %c0_i32 = arith.constant 0 : i32
    %c0_i32_0 = arith.constant 0 : i32
    %c0_i32_1 = arith.constant 0 : i32
    return %c0_i32, %c0_i32_0 : i32, i32
  }
  func.func @transform_3(%arg0: i32) -> (i32, i32) {
    %c0_i32 = arith.constant 0 : i32
    %c0_i32_0 = arith.constant 0 : i32
    %c0_i32_1 = arith.constant 0 : i32
    return %c0_i32, %c0_i32_0 : i32, i32
  }
  func.func @transform_4(%arg0: i32) -> (i32, i32) {
    %c0_i32 = arith.constant 0 : i32
    %c0_i32_0 = arith.constant 0 : i32
    %c0_i32_1 = arith.constant 0 : i32
    return %c0_i32, %c0_i32_0 : i32, i32
  }
  func.func @transform_5(%arg0: i32) -> (i32, i32) {
    %c0_i32 = arith.constant 0 : i32
    %c0_i32_0 = arith.constant 0 : i32
    %c0_i32_1 = arith.constant 0 : i32
    return %c0_i32, %c0_i32_0 : i32, i32
  }
}

</mosaic_0001>

<llo_original>
// kernel: tpu_custom_call.1
$region0: #{tpu_custom_call.1}
  #allocation0 [shape = 'u32[]', space=smem, size = 0x4, offset = 0x4, fixed_abs, tag = 'smem constant byte address 0x4 - core index']
  #allocation1 [shape = 'u32[144,128]{1,0:T(1,128)}', space=vmem, size = 0x12000, scoped, tag = 'internal scratch']
  %s0 = inlined_call_operand.vmem [shape: f32[2,4,256], index: 0, kind: input, shape index: {}]
  %s1 = inlined_call_operand.vmem [shape: f32[8,4], index: 1, kind: input, shape index: {}]
  %s2 = inlined_call_operand.vmem [shape: f32[8,1], index: 2, kind: input, shape index: {}]
  %s3 = inlined_call_operand.vmem [shape: f32[4,4], index: 3, kind: input, shape index: {}]
  %s4 = inlined_call_operand.vmem [shape: f32[1,4], index: 4, kind: input, shape index: {}]
  %s5 = inlined_call_operand.hbm [shape: f32[2,4], index: 5, kind: output, shape index: {}]
  %s6 = sld [smem:[#allocation0]]
  $region30: #{tpu_custom_call.1} parent=0
    _
  %s8 = ssub.s32 1, %s6
  %s9 = scalar_select 0, %s8, %s6
  $region1: #{tpu_custom_call.1} parent=0
    #allocation2 [shape = 'u8[1024]{0}', space=vmem, size = 0x400, scoped, tag = 'output window, operand 0, single buffered']
    #allocation3 [shape = 's32[1]{0}', space=sflag, size = 0x4, scoped, tag = 'scoped memory for tpu_custom_call.1']
    %10 = vsyncpa [#allocation3], 0
    // Predicated region
    $region2: #{tpu_custom_call.1} parent=1 // pred_check
      _
    $region3: #{tpu_custom_call.1} parent=1 // pred_check_branch
      %12 = sbr.rel (0) target = $region5
    $region4: #{tpu_custom_call.1} parent=1 // pred_region
      _
    $region5: #{tpu_custom_call.1} parent=1 // pred_fallthru
      _
    // Predicated region
    $region6: #{tpu_custom_call.1} parent=1 // pred_check
      _
    $region7: #{tpu_custom_call.1} parent=1 // pred_check_branch
      %14 = sbr.rel (0) target = $region9
    $region8: #{tpu_custom_call.1} parent=1 // pred_region
      _
    $region9: #{tpu_custom_call.1} parent=1 // pred_fallthru
      _
    // Predicated region
    $region10: #{tpu_custom_call.1} parent=1 // pred_check
      _
    $region11: #{tpu_custom_call.1} parent=1 // pred_check_branch
      %16 = sbr.rel (0) target = $region13
    $region12: #{tpu_custom_call.1} parent=1 // pred_region
      _
    $region13: #{tpu_custom_call.1} parent=1 // pred_fallthru
      _
    // Predicated region
    $region14: #{tpu_custom_call.1} parent=1 // pred_check
      _
    $region15: #{tpu_custom_call.1} parent=1 // pred_check_branch
      %18 = sbr.rel (0) target = $region17
    $region16: #{tpu_custom_call.1} parent=1 // pred_region
      _
    $region17: #{tpu_custom_call.1} parent=1 // pred_fallthru
      _
    // Predicated region
    $region18: #{tpu_custom_call.1} parent=1 // pred_check
      _
    $region19: #{tpu_custom_call.1} parent=1 // pred_check_branch
      %20 = sbr.rel (0) target = $region21
    $region20: #{tpu_custom_call.1} parent=1 // pred_region
      _
    $region21: #{tpu_custom_call.1} parent=1 // pred_fallthru
      _
    %v21 = vld [vmem:[%s1] sm:$0xff]
    %v22 = vld [vmem:[%s2] sm:$0xff]
    %v23 = vld [vmem:[%s3] sm:$0xf]
    %v24 = vld [vmem:[%s4] sm:$0x1]
    %v25 = vld [vmem:[%s0] sm:$0xff]
    %27 = vset.pattern.permute.xlu0 0
    %28 = vperm.xlu0 %27, %v22
    %v29 = vpop.permute.xlu0 %28
    %v32 = vcombine.high %v25, %v25
    %vm33 = vcmask 31744
    %v35 = vsel %vm33, %v21, 0
    %vm37 = vcmask 1043456
    %v38 = vsel %vm37, %v25, 0
    %v40 = vsel %vm37, %v32, 0
    %42 = vmatprep.subr.mxu0 %v40
    %43 = vmatpush1.msra.mxu0 %v38
    %44 = vmatprep.subr.mxu0 0.0
    %45 = vmatpush1.msra.mxu0 0.0
    %46 = vmatprep.subr.mxu0 0.0
    %47 = vmatpush1.msra.mxu0 0.0
    %48 = vmatprep.subr.mxu0 0.0
    %49 = vmatpush1.msra.mxu0 0.0
    %50 = vmatprep.subr.mxu0 0.0
    %51 = vmatpush1.msra.mxu0 0.0
    %52 = vmatprep.subr.mxu0 0.0
    %53 = vmatpush1.msra.mxu0 0.0
    %54 = vmatprep.subr.mxu0 0.0
    %55 = vmatpush1.msra.mxu0 0.0
    %56 = vmatprep.subr.mxu0 0.0
    %57 = vmatpush1.msra.mxu0 0.0
    %58 = vmatprep.subr.mxu0 0.0
    %59 = vmatpush1.msra.mxu0 0.0
    %60 = vmatprep.subr.mxu0 0.0
    %61 = vmatpush1.msra.mxu0 0.0
    %62 = vmatprep.subr.mxu0 0.0
    %63 = vmatpush1.msra.mxu0 0.0
    %64 = vmatprep.subr.mxu0 0.0
    %65 = vmatpush1.msra.mxu0 0.0
    %66 = vmatprep.subr.mxu0 0.0
    %67 = vmatpush1.msra.mxu0 0.0
    %68 = vmatprep.subr.mxu0 0.0
    %69 = vmatpush1.msra.mxu0 0.0
    %70 = vmatprep.subr.mxu0 0.0
    %71 = vmatpush1.msra.mxu0 0.0
    %72 = vmatprep.subr.mxu0 0.0
    %73 = vmatpush1.msra.mxu0 0.0
    %74 = vmatprep.subr.mxu0 0.0
    %75 = vmatpush1.msra.mxu0 0.0
    %76 = vmatprep.subr.mxu0 0.0
    %77 = vmatpush1.msra.mxu0 0.0
    %78 = vmatprep.subr.mxu0 0.0
    %79 = vmatpush1.msra.mxu0 0.0
    %80 = vmatprep.subr.mxu0 0.0
    %81 = vmatpush1.msra.mxu0 0.0
    %82 = vmatprep.subr.mxu0 0.0
    %83 = vmatpush1.msra.mxu0 0.0
    %84 = vmatprep.subr.mxu0 0.0
    %85 = vmatpush1.msra.mxu0 0.0
    %86 = vmatprep.subr.mxu0 0.0
    %87 = vmatpush1.msra.mxu0 0.0
    %88 = vmatprep.subr.mxu0 0.0
    %89 = vmatpush1.msra.mxu0 0.0
    %90 = vmatprep.subr.mxu0 0.0
    %91 = vmatpush1.msra.mxu0 0.0
    %92 = vmatprep.subr.mxu0 0.0
    %93 = vmatpush1.msra.mxu0 0.0
    %94 = vmatprep.subr.mxu0 0.0
    %95 = vmatpush1.msra.mxu0 0.0
    %96 = vmatprep.subr.mxu0 0.0
    %97 = vmatpush1.msra.mxu0 0.0
    %98 = vmatprep.subr.mxu0 0.0
    %99 = vmatpush1.msra.mxu0 0.0
    %100 = vmatprep.subr.mxu0 0.0
    %101 = vmatpush1.msra.mxu0 0.0
    %102 = vmatprep.subr.mxu0 0.0
    %103 = vmatpush1.msra.mxu0 0.0
    %104 = vmatprep.subr.mxu0 0.0
    %105 = vmatpush1.msra.mxu0 0.0
    %106 = vmatprep.mubr.f32.mxu0 0.0
    %107 = vmatmul.mubr.f32.gmra.mrb[0].mxu0 %v35
    %v108 = vpop.f32.mrb[0].mxu0
    %v109 = vadd.f32 %v29, %v108
    %v110 = vpop.f32.mrb[0].mxu0
    %v111 = vadd.f32 %v29, %v110
    %112 = vdwg.mxu0
    %v113 = vsel %vm37, %v109, -inf
    %v114 = vsel %vm37, %v111, -inf
    %v115 = vmax.f32 %v113, %v114
    %116 = vmax.xlane.f32.xlu0 %v115
    %v117 = vpop.xlane.xlu0 %116
    %v118 = vsub.f32 %v109, %v117
    %v119 = vsub.f32 %v111, %v117
    %v120 = vmul.f32 %v118, 1.442695
    %v121 = vpow.pop %v120
    %v122 = vmul.f32 %v119, 1.442695
    %v123 = vpow.pop %v122
    %v126 = vrot.slane %v109, 4
    %v127 = vrot.slane %v111, 4
    %v130 = vmul.f32 %v121, %v126
    %v131 = vmul.f32 %v123, %v127
    %v132 = vsel %vm37, %v130, 0.0
    %v133 = vsel %vm37, %v131, 0.0
    %v134 = vadd.f32 %v132, %v133
    %135 = vadd.xlane.f32.xlu0 %v134
    %v136 = vpop.xlane.xlu0 %135
    %v137 = vsel %vm37, %v121, 0.0
    %v138 = vsel %vm37, %v123, 0.0
    %v139 = vadd.f32 %v137, %v138
    %140 = vadd.xlane.f32.xlu0 %v139
    %v141 = vpop.xlane.xlu0 %140
    %v142 = vrcp.pop %v141
    %v143 = vmul.f32 %v136, %v142
    %v144 = vmul.f32 %v23, %v143
    %vm145 = vcmask 27648
    %v146 = vsel %vm145, %v144, 0.0
    %v147 = vrot.slane %v146, 4
    %v148 = vadd.f32 %v146, %v147
    %v149 = vrot.slane %v148, 2
    %v150 = vadd.f32 %v148, %v149
    %v151 = vrot.slane %v150, 1
    %v152 = vadd.f32 %v150, %v151
    %v153 = vadd.f32 %v152, %v24
    %v154 = vxor.u32 %v153, 2147483648
    %v155 = vmul.f32 %v154, 1.442695
    %v156 = vpow.pop %v155
    %v157 = vadd.f32 %v156, 1.0
    %v158 = vrcp.pop %v157
    %v159 = vmul.f32 1.0, %v158
    %s160 = scalar_lea.vmem %s0, 8
    %v161 = vld [vmem:[%s160] sm:$0xff]
    %v163 = vcombine.high %v161, %v161
    %v164 = vsel %vm37, %v161, 0
    %v166 = vsel %vm37, %v163, 0
    %168 = vmatprep.subr.mxu0 %v166
    %169 = vmatpush1.msra.mxu0 %v164
    %170 = vmatprep.subr.mxu0 0.0
    %171 = vmatpush1.msra.mxu0 0.0
    %172 = vmatprep.subr.mxu0 0.0
    %173 = vmatpush1.msra.mxu0 0.0
    %174 = vmatprep.subr.mxu0 0.0
    %175 = vmatpush1.msra.mxu0 0.0
    %176 = vmatprep.subr.mxu0 0.0
    %177 = vmatpush1.msra.mxu0 0.0
    %178 = vmatprep.subr.mxu0 0.0
    %179 = vmatpush1.msra.mxu0 0.0
    %180 = vmatprep.subr.mxu0 0.0
    %181 = vmatpush1.msra.mxu0 0.0
    %182 = vmatprep.subr.mxu0 0.0
    %183 = vmatpush1.msra.mxu0 0.0
    %184 = vmatprep.subr.mxu0 0.0
    %185 = vmatpush1.msra.mxu0 0.0
    %186 = vmatprep.subr.mxu0 0.0
    %187 = vmatpush1.msra.mxu0 0.0
    %188 = vmatprep.subr.mxu0 0.0
    %189 = vmatpush1.msra.mxu0 0.0
    %190 = vmatprep.subr.mxu0 0.0
    %191 = vmatpush1.msra.mxu0 0.0
    %192 = vmatprep.subr.mxu0 0.0
    %193 = vmatpush1.msra.mxu0 0.0
    %194 = vmatprep.subr.mxu0 0.0
    %195 = vmatpush1.msra.mxu0 0.0
    %196 = vmatprep.subr.mxu0 0.0
    %197 = vmatpush1.msra.mxu0 0.0
    %198 = vmatprep.subr.mxu0 0.0
    %199 = vmatpush1.msra.mxu0 0.0
    %200 = vmatprep.subr.mxu0 0.0
    %201 = vmatpush1.msra.mxu0 0.0
    %202 = vmatprep.subr.mxu0 0.0
    %203 = vmatpush1.msra.mxu0 0.0
    %204 = vmatprep.subr.mxu0 0.0
    %205 = vmatpush1.msra.mxu0 0.0
    %206 = vmatprep.subr.mxu0 0.0
    %207 = vmatpush1.msra.mxu0 0.0
    %208 = vmatprep.subr.mxu0 0.0
    %209 = vmatpush1.msra.mxu0 0.0
    %210 = vmatprep.subr.mxu0 0.0
    %211 = vmatpush1.msra.mxu0 0.0
    %212 = vmatprep.subr.mxu0 0.0
    %213 = vmatpush1.msra.mxu0 0.0
    %214 = vmatprep.subr.mxu0 0.0
    %215 = vmatpush1.msra.mxu0 0.0
    %216 = vmatprep.subr.mxu0 0.0
    %217 = vmatpush1.msra.mxu0 0.0
    %218 = vmatprep.subr.mxu0 0.0
    %219 = vmatpush1.msra.mxu0 0.0
    %220 = vmatprep.subr.mxu0 0.0
    %221 = vmatpush1.msra.mxu0 0.0
    %222 = vmatprep.subr.mxu0 0.0
    %223 = vmatpush1.msra.mxu0 0.0
    %224 = vmatprep.subr.mxu0 0.0
    %225 = vmatpush1.msra.mxu0 0.0
    %226 = vmatprep.subr.mxu0 0.0
    %227 = vmatpush1.msra.mxu0 0.0
    %228 = vmatprep.subr.mxu0 0.0
    %229 = vmatpush1.msra.mxu0 0.0
    %230 = vmatprep.subr.mxu0 0.0
    %231 = vmatpush1.msra.mxu0 0.0
    %232 = vmatprep.mubr.f32.mxu0 0.0
    %233 = vmatmul.mubr.f32.gmra.mrb[0].mxu0 %v35
    %v234 = vpop.f32.mrb[0].mxu0
    %v235 = vadd.f32 %v29, %v234
    %v236 = vpop.f32.mrb[0].mxu0
    %v237 = vadd.f32 %v29, %v236
    %238 = vdwg.mxu0
    %v239 = vsel %vm37, %v235, -inf
    %v240 = vsel %vm37, %v237, -inf
    %v241 = vmax.f32 %v239, %v240
    %242 = vmax.xlane.f32.xlu0 %v241
    %v243 = vpop.xlane.xlu0 %242
    %v244 = vsub.f32 %v235, %v243
    %v245 = vsub.f32 %v237, %v243
    %v246 = vmul.f32 %v244, 1.442695
    %v247 = vpow.pop %v246
    %v248 = vmul.f32 %v245, 1.442695
    %v249 = vpow.pop %v248
    %v252 = vrot.slane %v235, 4
    %v253 = vrot.slane %v237, 4
    %v256 = vmul.f32 %v247, %v252
    %v257 = vmul.f32 %v249, %v253
    %v258 = vsel %vm37, %v256, 0.0
    %v259 = vsel %vm37, %v257, 0.0
    %v260 = vadd.f32 %v258, %v259
    %261 = vadd.xlane.f32.xlu0 %v260
    %v262 = vpop.xlane.xlu0 %261
    %v263 = vsel %vm37, %v247, 0.0
    %v264 = vsel %vm37, %v249, 0.0
    %v265 = vadd.f32 %v263, %v264
    %266 = vadd.xlane.f32.xlu0 %v265
    %v267 = vpop.xlane.xlu0 %266
    %v268 = vrcp.pop %v267
    %v269 = vmul.f32 %v262, %v268
    %v270 = vmul.f32 %v23, %v269
    %v271 = vsel %vm145, %v270, 0.0
    %v272 = vrot.slane %v271, 4
    %v273 = vadd.f32 %v271, %v272
    %v274 = vrot.slane %v273, 2
    %v275 = vadd.f32 %v273, %v274
    %v276 = vrot.slane %v275, 1
    %v277 = vadd.f32 %v275, %v276
    %v278 = vadd.f32 %v277, %v24
    %v279 = vxor.u32 %v278, 2147483648
    %v280 = vmul.f32 %v279, 1.442695
    %v281 = vpow.pop %v280
    %v282 = vadd.f32 %v281, 1.0
    %v283 = vrcp.pop %v282
    %v284 = vmul.f32 1.0, %v283
    %v286 = vrot.slane %v284, 7
    %vm288 = vcmask 1040384
    %v289 = vsel %vm288, %v159, %v286
    %vm290 = vcmask 25600
    %291 = vst.msk [vmem:[#allocation2] sm:$0x3] %vm290, %v289
    // Predicated region
    $region22: #{tpu_custom_call.1} parent=1 // pred_check
      _
    $region23: #{tpu_custom_call.1} parent=1 // pred_check_branch
      %293 = sbr.rel (0) target = $region25
    $region24: #{tpu_custom_call.1} parent=1 // pred_region
      %s295 = ssub.s32 32, 32
      %296 = vsyncadd [#allocation3], %s295
      %s298 = sshll.u32 [#allocation2], 4
      %s299 = int_to_ptr.vmem [resolvable:$true] %s298
      %301 = dma.vmem_to_hbm [thread:$0]  %s299, 32, %s5, [#allocation3]
    $region25: #{tpu_custom_call.1} parent=1 // pred_fallthru
      _
    // Predicated region
    $region26: #{tpu_custom_call.1} parent=1 // pred_check
      _
    $region27: #{tpu_custom_call.1} parent=1 // pred_check_branch
      %303 = sbr.rel (0) target = $region29
    $region28: #{tpu_custom_call.1} parent=1 // pred_region
      %304 = dma.done [#allocation3], 32
    $region29: #{tpu_custom_call.1} parent=1 // pred_fallthru
      _
    %305 = vsyncpa [#allocation3], 1

</llo_original>
